<compile_context>
chip_gen: v7x
topology: tpu7x:2x2x1
jax: 0.10.0
libtpu: 0.0.40
codegen_flags: <defaults>
</compile_context>

<pallas_src>
import functools

import jax
import jax.numpy as jnp
from jax.experimental import pallas as pl
from jax.experimental.pallas import tpu as pltpu


def _post_elmo_kernel(num_layers, precision, *refs):
    """One M-tile: fused ScalarMix + Linear projection + boundary zero-fill + bias.

    refs (inputs then output):
      valid_ref : (TILE_M, 1) f32      -- 1.0 for rows that survive remove_sentence_boundaries
      act_refs  : num_layers x (TILE_M, D) source-dtype activations (full-T rows, flattened B*T)
      w_ref     : (L, D, P) compute-dtype, softmax(s)_l * gamma already folded into each slice
      b_ref     : (1, P)  f32
      out_ref   : (TILE_M, P) f32
    """
    valid_ref = refs[0]
    act_refs = refs[1:1 + num_layers]
    w_ref = refs[1 + num_layers]
    b_ref = refs[2 + num_layers]
    out_ref = refs[3 + num_layers]

    cdt = w_ref.dtype  # compute dtype (bf16 default); in-kernel cast keeps HBM reads at f32 src

    # ScalarMix + projection as L MXU passes accumulated in f32 -- equivalent to one
    # (TILE_M, L*D) @ (L*D, P) matmul, but each layer streams directly from its own HBM buffer.
    acc = jnp.dot(act_refs[0][...].astype(cdt), w_ref[0],
                  preferred_element_type=jnp.float32, precision=precision)
    for l in range(1, num_layers):
        acc += jnp.dot(act_refs[l][...].astype(cdt), w_ref[l],
                       preferred_element_type=jnp.float32, precision=precision)

    # remove_sentence_boundaries zero-fill: a single (TILE_M,1)-broadcast select (cheaper than
    # the previous full iota/compare).  Zeroed rows then pick up the bias, exactly like PyTorch
    # (zeroed representation rows go through the Linear and come out equal to the bias).
    # Remainder (out-of-bounds) rows of the last tile may compute on undefined buffer contents,
    # but Pallas drops their writeback, so no masking of them is required here.
    mixed = jnp.where(valid_ref[...] > 0.5, acc, 0.0)
    out_ref[...] = (mixed + b_ref[...]).astype(out_ref.dtype)


def post_elmo_forward(layer_activations, mask_with_bos_eos, scalar_params, gamma,
                      proj_w, proj_b, *, tile_m=1024, compute_dtype=jnp.bfloat16,
                      precision=None):
    """Fused PostElmo forward (eval mode, first output representation).

    layer_activations: list of L arrays of shape (B, T, D), or a stacked (L, B, T, D) array.
    Returns (B, T-2, P) float32, matching PostElmo.forward.

    compute_dtype controls the MXU input dtype (cast happens in-kernel; HBM reads stay in the
    source dtype).  For a reference-faithful f32 matmul pass compute_dtype=jnp.float32 and
    precision=jax.lax.Precision.HIGHEST.
    """
    if isinstance(layer_activations, (list, tuple)):
        acts_list = list(layer_activations)
    else:
        acts_list = [layer_activations[l] for l in range(layer_activations.shape[0])]
    L = len(acts_list)
    B, T, D = acts_list[0].shape
    P = proj_w.shape[1]
    M = B * T

    # ---- tiny wrapper-side parameter prep (negligible vs activation traffic) ----------------
    # Fold ScalarMix softmax weights + gamma into per-layer copies of the projection weight.
    s = jax.nn.softmax(scalar_params.astype(jnp.float32)) * jnp.float32(gamma)
    w_stack = (s[:, None, None] * proj_w.astype(jnp.float32)[None]).astype(compute_dtype)
    bias = proj_b.astype(jnp.float32).reshape(1, P)

    # Validity of each full-T row after remove_sentence_boundaries: row (b, t) survives iff
    # 1 <= t < len_b - 1.  O(B*T) bytes -- negligible next to the O(B*T*L*D) activation reads.
    lengths = jnp.sum(mask_with_bos_eos, axis=-1).astype(jnp.int32)
    t_idx = jnp.arange(T, dtype=jnp.int32)
    valid = (t_idx[None, :] >= 1) & (t_idx[None, :] < (lengths[:, None] - 1))
    valid = valid.astype(jnp.float32).reshape(M, 1)

    # Activations read in place: (B, T, D) -> (B*T, D) is a layout-preserving (copy-free)
    # reshape, and each layer goes to the kernel as its own input -> no concat, no host cast.
    acts_flat = [a.reshape(M, D) for a in acts_list]
    act_itemsize = jnp.dtype(acts_list[0].dtype).itemsize
    w_itemsize = jnp.dtype(compute_dtype).itemsize

    # M-tiling: 1024 rows keeps double-buffered blocks well inside v7x's 64 MiB VMEM while
    # amortizing the ~0.35 us per-grid-step overhead (v5e/v6e can pass tile_m=2048).
    if M <= tile_m:
        TILE_M = M                       # full dim -> exempt from the (8,128) divisibility rule
        num_m = 1
    else:
        TILE_M = max(8, (tile_m // 8) * 8)
        num_m = pl.cdiv(M, TILE_M)
        if num_m % 2 == 1:
            # v7x shards the "parallel" axis across 2 TensorCores: prefer an even step count.
            alt = max(8, ((pl.cdiv(M, num_m + 1) + 7) // 8) * 8)
            if pl.cdiv(M, alt) % 2 == 0:
                TILE_M, num_m = alt, pl.cdiv(M, alt)

    # VMEM budget: double-buffered act/out/valid blocks + (double-buffered) resident weight/bias
    # + headroom for Mosaic scratch; capped at v7x's 64 MiB physical VMEM.
    vmem_need = (2 * L * TILE_M * D * act_itemsize      # per-layer activation blocks
                 + 2 * TILE_M * P * 4                   # output blocks
                 + 2 * L * D * P * w_itemsize           # folded weight (grid-invariant)
                 + 2 * TILE_M * 4 + 2 * P * 4)          # valid column + bias
    vmem_limit = int(min(max(vmem_need + (16 << 20), 32 << 20), 64 << 20))

    cost = pl.CostEstimate(
        flops=2 * M * L * D * P,
        transcendentals=0,
        bytes_accessed=(L * M * D * act_itemsize        # activations, read in place
                        + L * D * P * w_itemsize        # folded weight
                        + M * 4 + P * 4                 # valid column + bias
                        + M * P * 4))                   # output

    in_specs = (
        [pl.BlockSpec((TILE_M, 1), lambda m: (m, 0))]                # valid-row multiplier
        + [pl.BlockSpec((TILE_M, D), lambda m: (m, 0))] * L          # per-layer activations
        + [pl.BlockSpec((L, D, P), lambda m: (0, 0, 0)),             # folded weight (resident)
           pl.BlockSpec((1, P), lambda m: (0, 0))])                  # bias (resident)

    out_flat = pl.pallas_call(
        functools.partial(_post_elmo_kernel, L, precision),
        out_shape=jax.ShapeDtypeStruct((M, P), jnp.float32),
        grid=(num_m,),
        in_specs=in_specs,
        out_specs=pl.BlockSpec((TILE_M, P), lambda m: (m, 0)),
        compiler_params=pltpu.CompilerParams(
            dimension_semantics=("parallel",),
            vmem_limit_bytes=vmem_limit),
        cost_estimate=cost,
    )(valid, *acts_flat, w_stack, bias)

    # BOS/EOS rows are dropped here.  This slice is the only extra HBM pass left and it is
    # O(B*T*P) -- small next to the O(B*T*L*D) activation reads the kernel now does in place.
    return out_flat.reshape(B, T, P)[:, 1:T - 1, :]


def post_elmo_reference(layer_activations, mask, scalar_params, gamma, pw, pb):
    """Pure-JAX reference matching the PyTorch forward (eval mode), full precision."""
    acts = jnp.stack(list(layer_activations), axis=0).astype(jnp.float32)   # (L, B, T, D)
    w = jax.nn.softmax(scalar_params) * gamma
    mix = jnp.einsum('l,lbtd->btd', w, acts, precision=jax.lax.Precision.HIGHEST)
    T = mask.shape[1]
    lengths = mask.sum(-1)
    core = mix[:, 1:T - 1, :]
    t_idx = jnp.arange(T - 2)
    valid = t_idx[None, :] < (lengths[:, None] - 2)
    core = jnp.where(valid[..., None], core, 0.0)
    return jnp.matmul(core, pw, precision=jax.lax.Precision.HIGHEST) + pb


if __name__ == "__main__":
    key = jax.random.PRNGKey(0)
    L, B, T, D, P = 3, 2, 8, 32, 16      # layers, batch, seq(+bos/eos), hidden, projection

    k1, k2, k3 = jax.random.split(key, 3)
    acts_list = [jax.random.normal(jax.random.fold_in(k1, l), (B, T, D), dtype=jnp.float32)
                 for l in range(L)]

    # per-row sequence lengths (including BOS/EOS); second row is shorter
    lengths = jnp.array([T, T - 2], dtype=jnp.int32)
    mask = (jnp.arange(T)[None, :] < lengths[:, None]).astype(jnp.int32)

    # deterministic synthetic parameters (no checkpoint)
    scalar_params = jnp.linspace(-0.5, 0.5, L).astype(jnp.float32)   # ScalarMix params
    gamma = jnp.float32(1.25)                                        # ScalarMix gamma
    proj_w = jax.random.normal(k2, (D, P), dtype=jnp.float32) * 0.1
    proj_b = jax.random.normal(k3, (P,), dtype=jnp.float32) * 0.1

    ref = post_elmo_reference(acts_list, mask, scalar_params, gamma, proj_w, proj_b)

    # float32 MXU path
    out_f32 = jax.block_until_ready(
        post_elmo_forward(acts_list, mask, scalar_params, gamma, proj_w, proj_b,
                          compute_dtype=jnp.float32))
    assert out_f32.shape == (B, T - 2, P), out_f32.shape
    assert jnp.allclose(out_f32, ref, atol=1e-2, rtol=1e-2), "f32 mismatch vs reference"

    # bfloat16 MXU path (default; activations still read as f32, cast in-kernel)
    out_bf16 = jax.block_until_ready(
        post_elmo_forward(acts_list, mask, scalar_params, gamma, proj_w, proj_b))
    assert out_bf16.shape == (B, T - 2, P), out_bf16.shape
    assert jnp.allclose(out_bf16, ref, atol=2e-2, rtol=2e-2), "bf16 mismatch vs reference"

    # larger sequence exercising the multi-tile flattened-M grid (full tile + remainder tile)
    T2 = 903
    acts_list2 = [jax.random.normal(jax.random.fold_in(k1, 100 + l), (B, T2, D),
                                    dtype=jnp.float32) for l in range(L)]
    lengths2 = jnp.array([T2, T2 - 7], dtype=jnp.int32)
    mask2 = (jnp.arange(T2)[None, :] < lengths2[:, None]).astype(jnp.int32)
    ref2 = post_elmo_reference(acts_list2, mask2, scalar_params, gamma, proj_w, proj_b)

    out2 = jax.block_until_ready(
        post_elmo_forward(acts_list2, mask2, scalar_params, gamma, proj_w, proj_b))
    assert out2.shape == (B, T2 - 2, P), out2.shape
    assert jnp.allclose(out2, ref2, atol=2e-2, rtol=2e-2), "multi-tile mismatch vs reference"

    # small tile_m exercising the odd->even tile-count adjustment and more grid steps
    out2b = jax.block_until_ready(
        post_elmo_forward(acts_list2, mask2, scalar_params, gamma, proj_w, proj_b, tile_m=264))
    assert jnp.allclose(out2b, ref2, atol=2e-2, rtol=2e-2), "small-tile mismatch vs reference"

    # stacked (L, B, T, D) input form is also accepted
    out3 = jax.block_until_ready(
        post_elmo_forward(jnp.stack(acts_list2), mask2, scalar_params, gamma, proj_w, proj_b))
    assert jnp.allclose(out3, ref2, atol=2e-2, rtol=2e-2), "stacked-input mismatch vs reference"

    print("KERNEL_OK")
</pallas_src>

<mosaic_0001>
module attributes {stable_mosaic.version = 11 : i64} {
  func.func @_post_elmo_kernel(%arg0: i32, %arg1: memref<16x1xf32, #tpu.memory_space<vmem>>, %arg2: memref<16x32xf32, #tpu.memory_space<vmem>>, %arg3: memref<16x32xf32, #tpu.memory_space<vmem>>, %arg4: memref<16x32xf32, #tpu.memory_space<vmem>>, %arg5: memref<3x32x16xf32, #tpu.memory_space<vmem>>, %arg6: memref<1x16xf32, #tpu.memory_space<vmem>>, %arg7: memref<16x16xf32, #tpu.memory_space<vmem>>) attributes {dimension_semantics = [#tpu.dimension_semantics<parallel>], iteration_bounds = array<i64: 1>, scalar_prefetch = 0 : i64, scratch_operands = 0 : i64, tpu.core_type = #tpu.core_type<tc>, window_params = [{transform_indices = @transform_0, window_bounds = array<i64: 16, 1>}, {transform_indices = @transform_1, window_bounds = array<i64: 16, 32>}, {transform_indices = @transform_2, window_bounds = array<i64: 16, 32>}, {transform_indices = @transform_3, window_bounds = array<i64: 16, 32>}, {pipeline_mode = #tpu.pipeline_mode<synchronous>, transform_indices = @transform_4, window_bounds = array<i64: 3, 32, 16>}, {pipeline_mode = #tpu.pipeline_mode<synchronous>, transform_indices = @transform_5, window_bounds = array<i64: 1, 16>}, {transform_indices = @transform_6, window_bounds = array<i64: 16, 16>}]} {
    %c0 = arith.constant 0 : index
    %c0_0 = arith.constant 0 : index
    %0 = vector.load %arg2[%c0, %c0_0] : memref<16x32xf32, #tpu.memory_space<vmem>>, vector<16x32xf32>
    %c0_1 = arith.constant 0 : index
    %c0_2 = arith.constant 0 : index
    %c0_3 = arith.constant 0 : index
    %1 = vector.load %arg5[%c0_1, %c0_2, %c0_3] : memref<3x32x16xf32, #tpu.memory_space<vmem>>, vector<1x32x16xf32>
    %2 = vector.shape_cast %1 : vector<1x32x16xf32> to vector<32x16xf32>
    %cst = arith.constant dense<0.000000e+00> : vector<16x16xf32>
    %3 = tpu.matmul %0, %2, %cst {dimension_numbers = #tpu.dot_dimension_numbers<[1], [0], [0], [1], [0, 0, 1, 1], [], []>} : vector<16x32xf32>, vector<32x16xf32>, vector<16x16xf32> -> vector<16x16xf32>
    %c0_4 = arith.constant 0 : index
    %c0_5 = arith.constant 0 : index
    %4 = vector.load %arg3[%c0_4, %c0_5] : memref<16x32xf32, #tpu.memory_space<vmem>>, vector<16x32xf32>
    %c1 = arith.constant 1 : index
    %c0_6 = arith.constant 0 : index
    %c0_7 = arith.constant 0 : index
    %5 = vector.load %arg5[%c1, %c0_6, %c0_7] : memref<3x32x16xf32, #tpu.memory_space<vmem>>, vector<1x32x16xf32>
    %6 = vector.shape_cast %5 : vector<1x32x16xf32> to vector<32x16xf32>
    %cst_8 = arith.constant dense<0.000000e+00> : vector<16x16xf32>
    %7 = tpu.matmul %4, %6, %cst_8 {dimension_numbers = #tpu.dot_dimension_numbers<[1], [0], [0], [1], [0, 0, 1, 1], [], []>} : vector<16x32xf32>, vector<32x16xf32>, vector<16x16xf32> -> vector<16x16xf32>
    %8 = arith.addf %3, %7 : vector<16x16xf32>
    %c0_9 = arith.constant 0 : index
    %c0_10 = arith.constant 0 : index
    %9 = vector.load %arg4[%c0_9, %c0_10] : memref<16x32xf32, #tpu.memory_space<vmem>>, vector<16x32xf32>
    %c2 = arith.constant 2 : index
    %c0_11 = arith.constant 0 : index
    %c0_12 = arith.constant 0 : index
    %10 = vector.load %arg5[%c2, %c0_11, %c0_12] : memref<3x32x16xf32, #tpu.memory_space<vmem>>, vector<1x32x16xf32>
    %11 = vector.shape_cast %10 : vector<1x32x16xf32> to vector<32x16xf32>
    %cst_13 = arith.constant dense<0.000000e+00> : vector<16x16xf32>
    %12 = tpu.matmul %9, %11, %cst_13 {dimension_numbers = #tpu.dot_dimension_numbers<[1], [0], [0], [1], [0, 0, 1, 1], [], []>} : vector<16x32xf32>, vector<32x16xf32>, vector<16x16xf32> -> vector<16x16xf32>
    %13 = arith.addf %8, %12 : vector<16x16xf32>
    %c0_14 = arith.constant 0 : index
    %c0_15 = arith.constant 0 : index
    %14 = vector.load %arg1[%c0_14, %c0_15] : memref<16x1xf32, #tpu.memory_space<vmem>>, vector<16x1xf32>
    %cst_16 = arith.constant 5.000000e-01 : f32
    %15 = vector.broadcast %cst_16 : f32 to vector<16x1xf32>
    %16 = arith.cmpf ogt, %14, %15 : vector<16x1xf32>
    %cst_17 = arith.constant 0.000000e+00 : f32
    %17 = vector.shape_cast %16 : vector<16x1xi1> to vector<16x1xi1>
    %18 = vector.broadcast %17 : vector<16x1xi1> to vector<16x16xi1>
    %19 = vector.broadcast %cst_17 : f32 to vector<16x16xf32>
    %20 = arith.select %18, %13, %19 : vector<16x16xi1>, vector<16x16xf32>
    %c0_18 = arith.constant 0 : index
    %c0_19 = arith.constant 0 : index
    %21 = vector.load %arg6[%c0_18, %c0_19] : memref<1x16xf32, #tpu.memory_space<vmem>>, vector<1x16xf32>
    %22 = vector.broadcast %21 : vector<1x16xf32> to vector<16x16xf32>
    %23 = arith.addf %20, %22 : vector<16x16xf32>
    %c0_20 = arith.constant 0 : index
    %c0_21 = arith.constant 0 : index
    %24 = vector.load %arg7[%c0_20, %c0_21] : memref<16x16xf32, #tpu.memory_space<vmem>>, vector<16x16xf32>
    tpu.vector_store %arg7[%c0_20, %c0_21], %23 {strides = array<i32>} : memref<16x16xf32, #tpu.memory_space<vmem>>, vector<16x16xf32>,
    return
  }
  func.func @transform_0(%arg0: i32) -> (i32, i32) {
    %c0_i32 = arith.constant 0 : i32
    %c0_i32_0 = arith.constant 0 : i32
    return %arg0, %c0_i32 : i32, i32
  }
  func.func @transform_1(%arg0: i32) -> (i32, i32) {
    %c0_i32 = arith.constant 0 : i32
    %c0_i32_0 = arith.constant 0 : i32
    return %arg0, %c0_i32 : i32, i32
  }
  func.func @transform_2(%arg0: i32) -> (i32, i32) {
    %c0_i32 = arith.constant 0 : i32
    %c0_i32_0 = arith.constant 0 : i32
    return %arg0, %c0_i32 : i32, i32
  }
  func.func @transform_3(%arg0: i32) -> (i32, i32) {
    %c0_i32 = arith.constant 0 : i32
    %c0_i32_0 = arith.constant 0 : i32
    return %arg0, %c0_i32 : i32, i32
  }
  func.func @transform_4(%arg0: i32) -> (i32, i32, i32) {
    %c0_i32 = arith.constant 0 : i32
    %c0_i32_0 = arith.constant 0 : i32
    %c0_i32_1 = arith.constant 0 : i32
    %c0_i32_2 = arith.constant 0 : i32
    return %c0_i32, %c0_i32_0, %c0_i32_1 : i32, i32, i32
  }
  func.func @transform_5(%arg0: i32) -> (i32, i32) {
    %c0_i32 = arith.constant 0 : i32
    %c0_i32_0 = arith.constant 0 : i32
    %c0_i32_1 = arith.constant 0 : i32
    return %c0_i32, %c0_i32_0 : i32, i32
  }
  func.func @transform_6(%arg0: i32) -> (i32, i32) {
    %c0_i32 = arith.constant 0 : i32
    %c0_i32_0 = arith.constant 0 : i32
    return %arg0, %c0_i32 : i32, i32
  }
}

</mosaic_0001>

<llo_original>
// kernel: tpu_custom_call.1
$region0: #{tpu_custom_call.1}
  #allocation0 [shape = 'u32[]', space=smem, size = 0x4, offset = 0x4, fixed_abs, tag = 'smem constant byte address 0x4 - core index']
  #allocation1 [shape = 'u32[144,128]{1,0:T(1,128)}', space=vmem, size = 0x12000, scoped, tag = 'internal scratch']
  %s0 = inlined_call_operand.vmem [shape: f32[16,1], index: 0, kind: input, shape index: {}]
  %s1 = inlined_call_operand.vmem [shape: f32[16,32], index: 1, kind: input, shape index: {}]
  %s2 = inlined_call_operand.vmem [shape: f32[16,32], index: 2, kind: input, shape index: {}]
  %s3 = inlined_call_operand.vmem [shape: f32[16,32], index: 3, kind: input, shape index: {}]
  %s4 = inlined_call_operand.vmem [shape: f32[3,32,16], index: 4, kind: input, shape index: {}]
  %s5 = inlined_call_operand.vmem [shape: f32[1,16], index: 5, kind: input, shape index: {}]
  %s6 = inlined_call_operand.hbm [shape: f32[16,16], index: 6, kind: output, shape index: {}]
  %s7 = sld [smem:[#allocation0]]
  $region34: #{tpu_custom_call.1} parent=0
    _
  %s9 = ssub.s32 1, %s7
  %s10 = scalar_select 0, %s9, %s7
  $region1: #{tpu_custom_call.1} parent=0
    #allocation2 [shape = 'u8[8192]{0}', space=vmem, size = 0x2000, scoped, tag = 'output window, operand 0, single buffered']
    #allocation3 [shape = 's32[1]{0}', space=sflag, size = 0x4, scoped, tag = 'scoped memory for tpu_custom_call.1']
    %11 = vsyncpa [#allocation3], 0
    // Predicated region
    $region2: #{tpu_custom_call.1} parent=1 // pred_check
      _
    $region3: #{tpu_custom_call.1} parent=1 // pred_check_branch
      %13 = sbr.rel (0) target = $region5
    $region4: #{tpu_custom_call.1} parent=1 // pred_region
      _
    $region5: #{tpu_custom_call.1} parent=1 // pred_fallthru
      _
    // Predicated region
    $region6: #{tpu_custom_call.1} parent=1 // pred_check
      _
    $region7: #{tpu_custom_call.1} parent=1 // pred_check_branch
      %15 = sbr.rel (0) target = $region9
    $region8: #{tpu_custom_call.1} parent=1 // pred_region
      _
    $region9: #{tpu_custom_call.1} parent=1 // pred_fallthru
      _
    // Predicated region
    $region10: #{tpu_custom_call.1} parent=1 // pred_check
      _
    $region11: #{tpu_custom_call.1} parent=1 // pred_check_branch
      %17 = sbr.rel (0) target = $region13
    $region12: #{tpu_custom_call.1} parent=1 // pred_region
      _
    $region13: #{tpu_custom_call.1} parent=1 // pred_fallthru
      _
    // Predicated region
    $region14: #{tpu_custom_call.1} parent=1 // pred_check
      _
    $region15: #{tpu_custom_call.1} parent=1 // pred_check_branch
      %19 = sbr.rel (0) target = $region17
    $region16: #{tpu_custom_call.1} parent=1 // pred_region
      _
    $region17: #{tpu_custom_call.1} parent=1 // pred_fallthru
      _
    // Predicated region
    $region18: #{tpu_custom_call.1} parent=1 // pred_check
      _
    $region19: #{tpu_custom_call.1} parent=1 // pred_check_branch
      %21 = sbr.rel (0) target = $region21
    $region20: #{tpu_custom_call.1} parent=1 // pred_region
      _
    $region21: #{tpu_custom_call.1} parent=1 // pred_fallthru
      _
    // Predicated region
    $region22: #{tpu_custom_call.1} parent=1 // pred_check
      _
    $region23: #{tpu_custom_call.1} parent=1 // pred_check_branch
      %23 = sbr.rel (0) target = $region25
    $region24: #{tpu_custom_call.1} parent=1 // pred_region
      _
    $region25: #{tpu_custom_call.1} parent=1 // pred_fallthru
      _
    %v24 = vld [vmem:[%s1] sm:$0xff]
    %v25 = vld [vmem:[%s1 + $0x8] sm:$0xff]
    %v26 = vld [vmem:[%s4] sm:$0xff]
    %v27 = vld [vmem:[%s4 + $0x8] sm:$0xff]
    %v28 = vld [vmem:[%s4 + $0x10] sm:$0xff]
    %v29 = vld [vmem:[%s4 + $0x18] sm:$0xff]
    %v30 = vld [vmem:[%s2] sm:$0xff]
    %v31 = vld [vmem:[%s2 + $0x8] sm:$0xff]
    %s32 = scalar_lea.vmem %s4, 32
    %v33 = vld [vmem:[%s32] sm:$0xff]
    %v34 = vld [vmem:[%s32 + $0x8] sm:$0xff]
    %v35 = vld [vmem:[%s32 + $0x10] sm:$0xff]
    %v36 = vld [vmem:[%s32 + $0x18] sm:$0xff]
    %vm37 = vcmask 261120
    %v39 = vsel %vm37, %v30, 0
    %v42 = vsel %vm37, %v31, 0
    %44 = vmatprep.subr.mxu0 0.0
    %45 = vmatpush1.msra.mxu0 %v33
    %46 = vmatprep.subr.mxu0 0.0
    %47 = vmatpush1.msra.mxu0 %v34
    %48 = vmatprep.subr.mxu0 0.0
    %49 = vmatpush1.msra.mxu0 %v35
    %50 = vmatprep.subr.mxu0 0.0
    %51 = vmatpush1.msra.mxu0 %v36
    %52 = vmatprep.subr.mxu0 0.0
    %53 = vmatpush1.msra.mxu0 0.0
    %54 = vmatprep.subr.mxu0 0.0
    %55 = vmatpush1.msra.mxu0 0.0
    %56 = vmatprep.subr.mxu0 0.0
    %57 = vmatpush1.msra.mxu0 0.0
    %58 = vmatprep.subr.mxu0 0.0
    %59 = vmatpush1.msra.mxu0 0.0
    %60 = vmatprep.subr.mxu0 0.0
    %61 = vmatpush1.msra.mxu0 0.0
    %62 = vmatprep.subr.mxu0 0.0
    %63 = vmatpush1.msra.mxu0 0.0
    %64 = vmatprep.subr.mxu0 0.0
    %65 = vmatpush1.msra.mxu0 0.0
    %66 = vmatprep.subr.mxu0 0.0
    %67 = vmatpush1.msra.mxu0 0.0
    %68 = vmatprep.subr.mxu0 0.0
    %69 = vmatpush1.msra.mxu0 0.0
    %70 = vmatprep.subr.mxu0 0.0
    %71 = vmatpush1.msra.mxu0 0.0
    %72 = vmatprep.subr.mxu0 0.0
    %73 = vmatpush1.msra.mxu0 0.0
    %74 = vmatprep.subr.mxu0 0.0
    %75 = vmatpush1.msra.mxu0 0.0
    %76 = vmatprep.subr.mxu0 0.0
    %77 = vmatpush1.msra.mxu0 0.0
    %78 = vmatprep.subr.mxu0 0.0
    %79 = vmatpush1.msra.mxu0 0.0
    %80 = vmatprep.subr.mxu0 0.0
    %81 = vmatpush1.msra.mxu0 0.0
    %82 = vmatprep.subr.mxu0 0.0
    %83 = vmatpush1.msra.mxu0 0.0
    %84 = vmatprep.subr.mxu0 0.0
    %85 = vmatpush1.msra.mxu0 0.0
    %86 = vmatprep.subr.mxu0 0.0
    %87 = vmatpush1.msra.mxu0 0.0
    %88 = vmatprep.subr.mxu0 0.0
    %89 = vmatpush1.msra.mxu0 0.0
    %90 = vmatprep.subr.mxu0 0.0
    %91 = vmatpush1.msra.mxu0 0.0
    %92 = vmatprep.subr.mxu0 0.0
    %93 = vmatpush1.msra.mxu0 0.0
    %94 = vmatprep.subr.mxu0 0.0
    %95 = vmatpush1.msra.mxu0 0.0
    %96 = vmatprep.subr.mxu0 0.0
    %97 = vmatpush1.msra.mxu0 0.0
    %98 = vmatprep.subr.mxu0 0.0
    %99 = vmatpush1.msra.mxu0 0.0
    %100 = vmatprep.subr.mxu0 0.0
    %101 = vmatpush1.msra.mxu0 0.0
    %102 = vmatprep.subr.mxu0 0.0
    %103 = vmatpush1.msra.mxu0 0.0
    %104 = vmatprep.subr.mxu0 0.0
    %105 = vmatpush1.msra.mxu0 0.0
    %106 = vmatprep.subr.mxu0 0.0
    %107 = vmatpush1.msra.mxu0 0.0
    %108 = vmatprep.mubr.f32.mxu0 0.0
    %109 = vmatmul.mubr.f32.gmra.mrb[0].mxu0 %v39
    %v110 = vpop.f32.mrb[0].mxu0
    %v111 = vadd.f32 0.0, %v110
    %v112 = vpop.f32.mrb[0].mxu0
    %113 = vmatprep.mubr.f32.mxu0 0.0
    %114 = vmatmul.mubr.f32.gmra.mrb[0].mxu0 %v42
    %v115 = vpop.f32.mrb[0].mxu0
    %v116 = vadd.f32 0.0, %v115
    %v117 = vpop.f32.mrb[0].mxu0
    %118 = vdwg.mxu0
    %v120 = vsel %vm37, %v24, 0
    %v123 = vsel %vm37, %v25, 0
    %125 = vmatprep.subr.mxu0 0.0
    %126 = vmatpush1.msra.mxu0 %v26
    %127 = vmatprep.subr.mxu0 0.0
    %128 = vmatpush1.msra.mxu0 %v27
    %129 = vmatprep.subr.mxu0 0.0
    %130 = vmatpush1.msra.mxu0 %v28
    %131 = vmatprep.subr.mxu0 0.0
    %132 = vmatpush1.msra.mxu0 %v29
    %133 = vmatprep.subr.mxu0 0.0
    %134 = vmatpush1.msra.mxu0 0.0
    %135 = vmatprep.subr.mxu0 0.0
    %136 = vmatpush1.msra.mxu0 0.0
    %137 = vmatprep.subr.mxu0 0.0
    %138 = vmatpush1.msra.mxu0 0.0
    %139 = vmatprep.subr.mxu0 0.0
    %140 = vmatpush1.msra.mxu0 0.0
    %141 = vmatprep.subr.mxu0 0.0
    %142 = vmatpush1.msra.mxu0 0.0
    %143 = vmatprep.subr.mxu0 0.0
    %144 = vmatpush1.msra.mxu0 0.0
    %145 = vmatprep.subr.mxu0 0.0
    %146 = vmatpush1.msra.mxu0 0.0
    %147 = vmatprep.subr.mxu0 0.0
    %148 = vmatpush1.msra.mxu0 0.0
    %149 = vmatprep.subr.mxu0 0.0
    %150 = vmatpush1.msra.mxu0 0.0
    %151 = vmatprep.subr.mxu0 0.0
    %152 = vmatpush1.msra.mxu0 0.0
    %153 = vmatprep.subr.mxu0 0.0
    %154 = vmatpush1.msra.mxu0 0.0
    %155 = vmatprep.subr.mxu0 0.0
    %156 = vmatpush1.msra.mxu0 0.0
    %157 = vmatprep.subr.mxu0 0.0
    %158 = vmatpush1.msra.mxu0 0.0
    %159 = vmatprep.subr.mxu0 0.0
    %160 = vmatpush1.msra.mxu0 0.0
    %161 = vmatprep.subr.mxu0 0.0
    %162 = vmatpush1.msra.mxu0 0.0
    %163 = vmatprep.subr.mxu0 0.0
    %164 = vmatpush1.msra.mxu0 0.0
    %165 = vmatprep.subr.mxu0 0.0
    %166 = vmatpush1.msra.mxu0 0.0
    %167 = vmatprep.subr.mxu0 0.0
    %168 = vmatpush1.msra.mxu0 0.0
    %169 = vmatprep.subr.mxu0 0.0
    %170 = vmatpush1.msra.mxu0 0.0
    %171 = vmatprep.subr.mxu0 0.0
    %172 = vmatpush1.msra.mxu0 0.0
    %173 = vmatprep.subr.mxu0 0.0
    %174 = vmatpush1.msra.mxu0 0.0
    %175 = vmatprep.subr.mxu0 0.0
    %176 = vmatpush1.msra.mxu0 0.0
    %177 = vmatprep.subr.mxu0 0.0
    %178 = vmatpush1.msra.mxu0 0.0
    %179 = vmatprep.subr.mxu0 0.0
    %180 = vmatpush1.msra.mxu0 0.0
    %181 = vmatprep.subr.mxu0 0.0
    %182 = vmatpush1.msra.mxu0 0.0
    %183 = vmatprep.subr.mxu0 0.0
    %184 = vmatpush1.msra.mxu0 0.0
    %185 = vmatprep.subr.mxu0 0.0
    %186 = vmatpush1.msra.mxu0 0.0
    %187 = vmatprep.subr.mxu0 0.0
    %188 = vmatpush1.msra.mxu0 0.0
    %189 = vmatprep.mubr.f32.mxu0 0.0
    %190 = vmatmul.mubr.f32.gmra.mrb[0].mxu0 %v120
    %v191 = vpop.f32.mrb[0].mxu0
    %v192 = vadd.f32 %v111, %v191
    %v193 = vpop.f32.mrb[0].mxu0
    %194 = vmatprep.mubr.f32.mxu0 0.0
    %195 = vmatmul.mubr.f32.gmra.mrb[0].mxu0 %v123
    %v196 = vpop.f32.mrb[0].mxu0
    %v197 = vadd.f32 %v116, %v196
    %v198 = vpop.f32.mrb[0].mxu0
    %199 = vdwg.mxu0
    %v200 = vld [vmem:[%s3] sm:$0xff]
    %v201 = vld [vmem:[%s3 + $0x8] sm:$0xff]
    %s202 = scalar_lea.vmem %s4, 64
    %v203 = vld [vmem:[%s202] sm:$0xff]
    %v204 = vld [vmem:[%s202 + $0x8] sm:$0xff]
    %v205 = vld [vmem:[%s202 + $0x10] sm:$0xff]
    %v206 = vld [vmem:[%s202 + $0x18] sm:$0xff]
    %v208 = vsel %vm37, %v200, 0
    %v211 = vsel %vm37, %v201, 0
    %213 = vmatprep.subr.mxu0 0.0
    %214 = vmatpush1.msra.mxu0 %v203
    %215 = vmatprep.subr.mxu0 0.0
    %216 = vmatpush1.msra.mxu0 %v204
    %217 = vmatprep.subr.mxu0 0.0
    %218 = vmatpush1.msra.mxu0 %v205
    %219 = vmatprep.subr.mxu0 0.0
    %220 = vmatpush1.msra.mxu0 %v206
    %221 = vmatprep.subr.mxu0 0.0
    %222 = vmatpush1.msra.mxu0 0.0
    %223 = vmatprep.subr.mxu0 0.0
    %224 = vmatpush1.msra.mxu0 0.0
    %225 = vmatprep.subr.mxu0 0.0
    %226 = vmatpush1.msra.mxu0 0.0
    %227 = vmatprep.subr.mxu0 0.0
    %228 = vmatpush1.msra.mxu0 0.0
    %229 = vmatprep.subr.mxu0 0.0
    %230 = vmatpush1.msra.mxu0 0.0
    %231 = vmatprep.subr.mxu0 0.0
    %232 = vmatpush1.msra.mxu0 0.0
    %233 = vmatprep.subr.mxu0 0.0
    %234 = vmatpush1.msra.mxu0 0.0
    %235 = vmatprep.subr.mxu0 0.0
    %236 = vmatpush1.msra.mxu0 0.0
    %237 = vmatprep.subr.mxu0 0.0
    %238 = vmatpush1.msra.mxu0 0.0
    %239 = vmatprep.subr.mxu0 0.0
    %240 = vmatpush1.msra.mxu0 0.0
    %241 = vmatprep.subr.mxu0 0.0
    %242 = vmatpush1.msra.mxu0 0.0
    %243 = vmatprep.subr.mxu0 0.0
    %244 = vmatpush1.msra.mxu0 0.0
    %245 = vmatprep.subr.mxu0 0.0
    %246 = vmatpush1.msra.mxu0 0.0
    %247 = vmatprep.subr.mxu0 0.0
    %248 = vmatpush1.msra.mxu0 0.0
    %249 = vmatprep.subr.mxu0 0.0
    %250 = vmatpush1.msra.mxu0 0.0
    %251 = vmatprep.subr.mxu0 0.0
    %252 = vmatpush1.msra.mxu0 0.0
    %253 = vmatprep.subr.mxu0 0.0
    %254 = vmatpush1.msra.mxu0 0.0
    %255 = vmatprep.subr.mxu0 0.0
    %256 = vmatpush1.msra.mxu0 0.0
    %257 = vmatprep.subr.mxu0 0.0
    %258 = vmatpush1.msra.mxu0 0.0
    %259 = vmatprep.subr.mxu0 0.0
    %260 = vmatpush1.msra.mxu0 0.0
    %261 = vmatprep.subr.mxu0 0.0
    %262 = vmatpush1.msra.mxu0 0.0
    %263 = vmatprep.subr.mxu0 0.0
    %264 = vmatpush1.msra.mxu0 0.0
    %265 = vmatprep.subr.mxu0 0.0
    %266 = vmatpush1.msra.mxu0 0.0
    %267 = vmatprep.subr.mxu0 0.0
    %268 = vmatpush1.msra.mxu0 0.0
    %269 = vmatprep.subr.mxu0 0.0
    %270 = vmatpush1.msra.mxu0 0.0
    %271 = vmatprep.subr.mxu0 0.0
    %272 = vmatpush1.msra.mxu0 0.0
    %273 = vmatprep.subr.mxu0 0.0
    %274 = vmatpush1.msra.mxu0 0.0
    %275 = vmatprep.subr.mxu0 0.0
    %276 = vmatpush1.msra.mxu0 0.0
    %277 = vmatprep.mubr.f32.mxu0 0.0
    %278 = vmatmul.mubr.f32.gmra.mrb[0].mxu0 %v208
    %v279 = vpop.f32.mrb[0].mxu0
    %v280 = vadd.f32 0.0, %v279
    %v281 = vpop.f32.mrb[0].mxu0
    %282 = vmatprep.mubr.f32.mxu0 0.0
    %283 = vmatmul.mubr.f32.gmra.mrb[0].mxu0 %v211
    %v284 = vpop.f32.mrb[0].mxu0
    %v285 = vadd.f32 0.0, %v284
    %v286 = vpop.f32.mrb[0].mxu0
    %287 = vdwg.mxu0
    %v288 = vadd.f32 %v192, %v280
    %v289 = vadd.f32 %v197, %v285
    %v290 = vld [vmem:[%s0] sm:$0xff]
    %v291 = vld [vmem:[%s0 + $0x8] sm:$0xff]
    %vm292 = vcmp.gt.f32.partialorder %v290, 0.5
    %vm293 = vcmp.gt.f32.partialorder %v291, 0.5
    %v294 = vsel %vm292, 1, 0
    %v295 = vsel %vm293, 1, 0
    %296 = vset.pattern.permute.xlu0 0
    %297 = vperm.xlu0 %296, %v294
    %v298 = vpop.permute.xlu0 %297
    %299 = vset.pattern.permute.xlu0 0
    %300 = vperm.xlu0 %299, %v295
    %v301 = vpop.permute.xlu0 %300
    %vm302 = vcmp.eq.s32.totalorder %v298, 1
    %vm303 = vcmp.eq.s32.totalorder %v301, 1
    %v304 = vsel %vm302, %v288, 0.0
    %v305 = vsel %vm303, %v289, 0.0
    %v306 = vld [vmem:[%s5] sm:$0x1]
    %v308 = vlaneseq
    %v309 = vshrl.u32 %v308, 7
    %v310 = vsub.s32 0, %v309
    %v311 = vrot.slane %v306, %v310
    %v313 = vadd.f32 %v304, %v311
    %v314 = vadd.f32 %v305, %v311
    %vm315 = vcmask 130048
    %316 = vst.msk [vmem:[#allocation2] sm:$0xff] %vm315, %v313
    %317 = vst.msk [vmem:[#allocation2 + $0x8] sm:$0xff] %vm315, %v314
    // Predicated region
    $region26: #{tpu_custom_call.1} parent=1 // pred_check
      _
    $region27: #{tpu_custom_call.1} parent=1 // pred_check_branch
      %319 = sbr.rel (0) target = $region29
    $region28: #{tpu_custom_call.1} parent=1 // pred_region
      %s321 = ssub.s32 256, 256
      %322 = vsyncadd [#allocation3], %s321
      %s323 = sshll.u32 [#allocation2], 4
      %s324 = int_to_ptr.vmem [resolvable:$true] %s323
      %329 = dma.vmem_to_hbm [thread:$0]  %s324, 256, %s6, [#allocation3], 128, 128, 8
    $region29: #{tpu_custom_call.1} parent=1 // pred_fallthru
      _
    // Predicated region
    $region30: #{tpu_custom_call.1} parent=1 // pred_check
      _
    $region31: #{tpu_custom_call.1} parent=1 // pred_check_branch
      %331 = sbr.rel (0) target = $region33
    $region32: #{tpu_custom_call.1} parent=1 // pred_region
      %332 = dma.done [#allocation3], 256
    $region33: #{tpu_custom_call.1} parent=1 // pred_fallthru
      _
    %333 = vsyncpa [#allocation3], 1

</llo_original>
